<compile_context>
chip_gen: v5e
topology: v5e:2x2
jax: 0.10.0
libtpu: 0.0.40
codegen_flags: <defaults>
</compile_context>

<pallas_src>
import math
import functools

import jax
import jax.numpy as jnp
from jax import lax
from jax.experimental import pallas as pl
from jax.experimental.pallas import tpu as pltpu


def _attn_block_kernel(x_ref, wqkv_ref, bqkv_ref, wo_ref, bo_ref,
                       gamma_ref, beta_ref, o_ref, *, num_heads: int, eps: float):
    # x block: (S, Bt, D) f32 — PyTorch (seq, batch, dim) layout, no transposes anywhere.
    x3 = x_ref[...]
    S, Bt, D = x3.shape
    H = num_heads
    hd = D // H
    N = S * Bt
    scale = 1.0 / math.sqrt(hd)

    # Seq-major rows: row r  <->  (s = r // Bt, b = r % Bt).  Row-wise ops are layout-agnostic.
    x2 = x3.reshape(N, D)                                          # (N, D) f32

    # --- fused QKV projection: one bf16 MXU matmul, f32 accumulation, f32 bias ---
    qkv = jnp.dot(x2.astype(jnp.bfloat16), wqkv_ref[...],
                  preferred_element_type=jnp.float32) + bqkv_ref[...]      # (N, 3D) f32

    # bf16 operands for all attention matmuls (scores included); scale folded into q in f32.
    q = (qkv[:, :D] * scale).astype(jnp.bfloat16)                  # (N, D) bf16
    k = qkv[:, D:2 * D].astype(jnp.bfloat16)
    v = qkv[:, 2 * D:].astype(jnp.bfloat16)

    # Stack heads along a new leading "batch" axis (32-aligned lane slices + leading stack).
    qh = jnp.stack([q[:, h * hd:(h + 1) * hd] for h in range(H)], axis=0)  # (H, N, hd)
    kh = jnp.stack([k[:, h * hd:(h + 1) * hd] for h in range(H)], axis=0)
    vh = jnp.stack([v[:, h * hd:(h + 1) * hd] for h in range(H)], axis=0)

    # --- attention: one leading-batch scores einsum over all heads ---
    s = jnp.einsum("hqd,hkd->hqk", qh, kh,
                   preferred_element_type=jnp.float32)             # (H, N, N) f32

    if Bt > 1:
        # Block-diagonal segment mask: rows r, r' attend only within the same batch element.
        rb = lax.broadcasted_iota(jnp.int32, (N, N), 0) % Bt
        cb = lax.broadcasted_iota(jnp.int32, (N, N), 1) % Bt
        s = jnp.where((rb == cb)[None, :, :], s, -1e30)

    # Softmax in f32; denominator via the EUP approximate reciprocal.
    s = s - jnp.max(s, axis=-1, keepdims=True)
    p = jnp.exp(s)
    p = p * pl.reciprocal(jnp.sum(p, axis=-1, keepdims=True), approx=True)

    ctx = jnp.einsum("hqk,hkd->hqd", p.astype(jnp.bfloat16), vh,
                     preferred_element_type=jnp.float32)           # (H, N, hd) f32

    # Output projection: one batched einsum over heads (wo_ref is (H, hd, D)), then head-sum.
    partial = jnp.einsum("hnd,hde->hne", ctx.astype(jnp.bfloat16), wo_ref[...],
                         preferred_element_type=jnp.float32)       # (H, N, D) f32
    attn_out = jnp.sum(partial, axis=0) + bo_ref[...]              # (N, D) f32

    # --- residual (+ dropout as identity, eval mode) and f32 LayerNorm ---
    res = x2 + attn_out
    mean = jnp.mean(res, axis=-1, keepdims=True)
    var = jnp.mean((res - mean) ** 2, axis=-1, keepdims=True)
    y = (res - mean) * lax.rsqrt(var + eps)
    y = y * gamma_ref[...] + beta_ref[...]
    o_ref[...] = y.reshape(S, Bt, D)                               # same (seq, batch, dim) layout


def prepare_attn_params(params, *, num_heads: int = 4):
    """One-time parameter prep (do NOT call per forward): fused/transposed bf16 weights,
    per-head Wo, and f32 bias/LN rows."""
    D = params["wq"].shape[0]
    hd = D // num_heads
    wqkv_t = jnp.concatenate(
        [params["wq"].T, params["wk"].T, params["wv"].T], axis=1).astype(jnp.bfloat16)   # (D, 3D)
    bqkv = jnp.concatenate(
        [params["bq"], params["bk"], params["bv"]]).reshape(1, 3 * D).astype(jnp.float32)
    wo_heads = params["wo"].T.reshape(num_heads, hd, D).astype(jnp.bfloat16)             # (H, hd, D)
    bo = params["bo"].reshape(1, D).astype(jnp.float32)
    gamma = params["ln_w"].reshape(1, D).astype(jnp.float32)
    beta = params["ln_b"].reshape(1, D).astype(jnp.float32)
    return {"wqkv_t": wqkv_t, "bqkv": bqkv, "wo_heads": wo_heads,
            "bo": bo, "gamma": gamma, "beta": beta}


def cross_modal_attn_block(x_sbd, prepared, *, num_heads: int = 4, eps: float = 1e-5,
                           batch_blocks: int = 1):
    """x_sbd: (S, B, D) float32, like PyTorch nn.MultiheadAttention (batch_first=False).

    batch_blocks: optional batch split over the grid (dual-TC chips).  Defaults to 1 — at
    small B*S a split only duplicates the weight DMA and per-step overhead.  Opt in only
    when (B // batch_blocks) * S >= ~256 rows per core and (B // batch_blocks) % 8 == 0
    (second-minor block alignment).
    """
    S, B, D = x_sbd.shape
    H = num_heads
    assert D % H == 0
    assert B % batch_blocks == 0
    Bt = B // batch_blocks
    assert batch_blocks == 1 or Bt % 8 == 0, \
        "per-block batch must be sublane-aligned (multiple of 8) when splitting"
    hd = D // H

    x = x_sbd.astype(jnp.float32)

    def full_spec(shape):
        return pl.BlockSpec(shape, lambda g: (0,) * len(shape))

    out = pl.pallas_call(
        functools.partial(_attn_block_kernel, num_heads=num_heads, eps=eps),
        out_shape=jax.ShapeDtypeStruct((S, B, D), jnp.float32),
        grid_spec=pltpu.PrefetchScalarGridSpec(
            num_scalar_prefetch=0,
            grid=(batch_blocks,),
            in_specs=[
                pl.BlockSpec((S, Bt, D), lambda g: (0, g, 0)),  # x (seq, batch, dim)
                full_spec((D, 3 * D)),                          # wqkv_t (bf16)
                full_spec((1, 3 * D)),                          # bqkv (f32)
                full_spec((H, hd, D)),                          # wo per-head (bf16)
                full_spec((1, D)),                              # bo
                full_spec((1, D)),                              # gamma
                full_spec((1, D)),                              # beta
            ],
            out_specs=pl.BlockSpec((S, Bt, D), lambda g: (0, g, 0)),
        ),
        compiler_params=pltpu.CompilerParams(
            dimension_semantics=("parallel",),
            # Tiny working set (<1 MiB); re-derive and weight-tile before scaling D/S
            # (v7x physical VMEM is 64 MiB vs 128 MiB on v5e/v6e).
            vmem_limit_bytes=16 * 1024 * 1024,
        ),
    )(x, prepared["wqkv_t"], prepared["bqkv"], prepared["wo_heads"],
      prepared["bo"], prepared["gamma"], prepared["beta"])
    return out  # (S, B, D)


def _reference(x_sbd, params, num_heads=4, eps=1e-5):
    """Pure-JAX f32 reference mirroring PyTorch MultiheadAttention (eval) + residual + LayerNorm."""
    S, B, D = x_sbd.shape
    hd = D // num_heads
    x = x_sbd.astype(jnp.float32)
    q = jnp.einsum("sbd,ed->sbe", x, params["wq"]) + params["bq"]
    k = jnp.einsum("sbd,ed->sbe", x, params["wk"]) + params["bk"]
    v = jnp.einsum("sbd,ed->sbe", x, params["wv"]) + params["bv"]
    q = q.reshape(S, B, num_heads, hd) / math.sqrt(hd)
    k = k.reshape(S, B, num_heads, hd)
    v = v.reshape(S, B, num_heads, hd)
    s = jnp.einsum("qbhd,kbhd->bhqk", q, k)
    p = jax.nn.softmax(s, axis=-1)
    ctx = jnp.einsum("bhqk,kbhd->qbhd", p, v).reshape(S, B, D)
    attn_out = jnp.einsum("sbd,ed->sbe", ctx, params["wo"]) + params["bo"]
    res = x + attn_out
    mean = jnp.mean(res, axis=-1, keepdims=True)
    var = jnp.mean((res - mean) ** 2, axis=-1, keepdims=True)
    return (res - mean) / jnp.sqrt(var + eps) * params["ln_w"] + params["ln_b"]


def _init_params(key, dim):
    ks = jax.random.split(key, 8)
    std = 1.0 / math.sqrt(dim)
    return {
        # PyTorch convention: projection weights are (out, in); y = x @ W^T + b
        "wq": jax.random.uniform(ks[0], (dim, dim), jnp.float32, -std, std),
        "wk": jax.random.uniform(ks[1], (dim, dim), jnp.float32, -std, std),
        "wv": jax.random.uniform(ks[2], (dim, dim), jnp.float32, -std, std),
        "wo": jax.random.uniform(ks[3], (dim, dim), jnp.float32, -std, std),
        "bq": jax.random.uniform(ks[4], (dim,), jnp.float32, -std, std),
        "bk": jax.random.uniform(ks[5], (dim,), jnp.float32, -std, std),
        "bv": jax.random.uniform(ks[6], (dim,), jnp.float32, -std, std),
        "bo": jax.random.uniform(ks[7], (dim,), jnp.float32, -std, std),
        "ln_w": jnp.ones((dim,), jnp.float32),
        "ln_b": jnp.zeros((dim,), jnp.float32),
    }


if __name__ == "__main__":
    DIM, HEADS, SEQ, BATCH = 128, 4, 8, 2

    key = jax.random.PRNGKey(0)
    k_x, k_p = jax.random.split(key)
    x = jax.random.normal(k_x, (SEQ, BATCH, DIM), jnp.float32)   # (S, B, D) PyTorch layout
    params = _init_params(k_p, DIM)

    prepared = prepare_attn_params(params, num_heads=HEADS)      # one-time weight prep

    out = cross_modal_attn_block(x, prepared, num_heads=HEADS)
    out = jax.block_until_ready(out)

    ref = _reference(x, params, num_heads=HEADS)
    assert out.shape == (SEQ, BATCH, DIM)
    # Tolerance sized for bf16 weights/activations/scores on the MXU (f32 accum, f32 softmax/LN).
    assert jnp.allclose(out, ref, atol=3e-2, rtol=3e-2), "mismatch vs reference"

    print("KERNEL_OK")
</pallas_src>

<mosaic_0001>
module attributes {stable_mosaic.version = 11 : i64} {
  func.func @_attn_block_kernel(%arg0: i32, %arg1: memref<8x2x128xf32, #tpu.memory_space<vmem>>, %arg2: memref<128x384xbf16, #tpu.memory_space<vmem>>, %arg3: memref<1x384xf32, #tpu.memory_space<vmem>>, %arg4: memref<4x32x128xbf16, #tpu.memory_space<vmem>>, %arg5: memref<1x128xf32, #tpu.memory_space<vmem>>, %arg6: memref<1x128xf32, #tpu.memory_space<vmem>>, %arg7: memref<1x128xf32, #tpu.memory_space<vmem>>, %arg8: memref<8x2x128xf32, #tpu.memory_space<vmem>>) attributes {dimension_semantics = [#tpu.dimension_semantics<parallel>], iteration_bounds = array<i64: 1>, scalar_prefetch = 0 : i64, scratch_operands = 0 : i64, tpu.core_type = #tpu.core_type<tc>, window_params = [{transform_indices = @transform_0, window_bounds = array<i64: 8, 2, 128>}, {pipeline_mode = #tpu.pipeline_mode<synchronous>, transform_indices = @transform_1, window_bounds = array<i64: 128, 384>}, {pipeline_mode = #tpu.pipeline_mode<synchronous>, transform_indices = @transform_2, window_bounds = array<i64: 1, 384>}, {pipeline_mode = #tpu.pipeline_mode<synchronous>, transform_indices = @transform_3, window_bounds = array<i64: 4, 32, 128>}, {pipeline_mode = #tpu.pipeline_mode<synchronous>, transform_indices = @transform_4, window_bounds = array<i64: 1, 128>}, {pipeline_mode = #tpu.pipeline_mode<synchronous>, transform_indices = @transform_5, window_bounds = array<i64: 1, 128>}, {pipeline_mode = #tpu.pipeline_mode<synchronous>, transform_indices = @transform_6, window_bounds = array<i64: 1, 128>}, {transform_indices = @transform_7, window_bounds = array<i64: 8, 2, 128>}]} {
    %c0 = arith.constant 0 : index
    %c0_0 = arith.constant 0 : index
    %c0_1 = arith.constant 0 : index
    %0 = vector.load %arg1[%c0, %c0_0, %c0_1] : memref<8x2x128xf32, #tpu.memory_space<vmem>>, vector<8x2x128xf32>
    %1 = vector.shape_cast %0 : vector<8x2x128xf32> to vector<16x128xf32>
    %2 = arith.truncf %1 : vector<16x128xf32> to vector<16x128xbf16>
    %c0_2 = arith.constant 0 : index
    %c0_3 = arith.constant 0 : index
    %3 = vector.load %arg2[%c0_2, %c0_3] : memref<128x384xbf16, #tpu.memory_space<vmem>>, vector<128x384xbf16>
    %cst = arith.constant dense<0.000000e+00> : vector<16x384xf32>
    %4 = tpu.matmul %2, %3, %cst {dimension_numbers = #tpu.dot_dimension_numbers<[1], [0], [0], [1], [0, 0, 1, 1], [], []>} : vector<16x128xbf16>, vector<128x384xbf16>, vector<16x384xf32> -> vector<16x384xf32>
    %c0_4 = arith.constant 0 : index
    %c0_5 = arith.constant 0 : index
    %5 = vector.load %arg3[%c0_4, %c0_5] : memref<1x384xf32, #tpu.memory_space<vmem>>, vector<1x384xf32>
    %6 = vector.broadcast %5 : vector<1x384xf32> to vector<16x384xf32>
    %7 = arith.addf %4, %6 : vector<16x384xf32>
    %8 = vector.extract_strided_slice %7 {offsets = [0, 0], sizes = [16, 128], strides = [1, 1]} : vector<16x384xf32> to vector<16x128xf32>
    %cst_6 = arith.constant 0.176776692 : f32
    %9 = vector.broadcast %cst_6 : f32 to vector<16x128xf32>
    %10 = arith.mulf %8, %9 : vector<16x128xf32>
    %11 = arith.truncf %10 : vector<16x128xf32> to vector<16x128xbf16>
    %12 = vector.extract_strided_slice %7 {offsets = [0, 128], sizes = [16, 128], strides = [1, 1]} : vector<16x384xf32> to vector<16x128xf32>
    %13 = arith.truncf %12 : vector<16x128xf32> to vector<16x128xbf16>
    %14 = vector.extract_strided_slice %7 {offsets = [0, 256], sizes = [16, 128], strides = [1, 1]} : vector<16x384xf32> to vector<16x128xf32>
    %15 = arith.truncf %14 : vector<16x128xf32> to vector<16x128xbf16>
    %16 = vector.extract_strided_slice %11 {offsets = [0, 0], sizes = [16, 32], strides = [1, 1]} : vector<16x128xbf16> to vector<16x32xbf16>
    %17 = vector.extract_strided_slice %11 {offsets = [0, 32], sizes = [16, 32], strides = [1, 1]} : vector<16x128xbf16> to vector<16x32xbf16>
    %18 = vector.extract_strided_slice %11 {offsets = [0, 64], sizes = [16, 32], strides = [1, 1]} : vector<16x128xbf16> to vector<16x32xbf16>
    %19 = vector.extract_strided_slice %11 {offsets = [0, 96], sizes = [16, 32], strides = [1, 1]} : vector<16x128xbf16> to vector<16x32xbf16>
    %20 = vector.shape_cast %16 : vector<16x32xbf16> to vector<1x16x32xbf16>
    %21 = vector.shape_cast %17 : vector<16x32xbf16> to vector<1x16x32xbf16>
    %22 = vector.shape_cast %18 : vector<16x32xbf16> to vector<1x16x32xbf16>
    %23 = vector.shape_cast %19 : vector<16x32xbf16> to vector<1x16x32xbf16>
    %24 = tpu.concatenate %20, %21, %22, %23 in 0 : vector<1x16x32xbf16>, vector<1x16x32xbf16>, vector<1x16x32xbf16>, vector<1x16x32xbf16> -> vector<4x16x32xbf16>
    %25 = vector.extract_strided_slice %13 {offsets = [0, 0], sizes = [16, 32], strides = [1, 1]} : vector<16x128xbf16> to vector<16x32xbf16>
    %26 = vector.extract_strided_slice %13 {offsets = [0, 32], sizes = [16, 32], strides = [1, 1]} : vector<16x128xbf16> to vector<16x32xbf16>
    %27 = vector.extract_strided_slice %13 {offsets = [0, 64], sizes = [16, 32], strides = [1, 1]} : vector<16x128xbf16> to vector<16x32xbf16>
    %28 = vector.extract_strided_slice %13 {offsets = [0, 96], sizes = [16, 32], strides = [1, 1]} : vector<16x128xbf16> to vector<16x32xbf16>
    %29 = vector.shape_cast %25 : vector<16x32xbf16> to vector<1x16x32xbf16>
    %30 = vector.shape_cast %26 : vector<16x32xbf16> to vector<1x16x32xbf16>
    %31 = vector.shape_cast %27 : vector<16x32xbf16> to vector<1x16x32xbf16>
    %32 = vector.shape_cast %28 : vector<16x32xbf16> to vector<1x16x32xbf16>
    %33 = tpu.concatenate %29, %30, %31, %32 in 0 : vector<1x16x32xbf16>, vector<1x16x32xbf16>, vector<1x16x32xbf16>, vector<1x16x32xbf16> -> vector<4x16x32xbf16>
    %34 = vector.extract_strided_slice %15 {offsets = [0, 0], sizes = [16, 32], strides = [1, 1]} : vector<16x128xbf16> to vector<16x32xbf16>
    %35 = vector.extract_strided_slice %15 {offsets = [0, 32], sizes = [16, 32], strides = [1, 1]} : vector<16x128xbf16> to vector<16x32xbf16>
    %36 = vector.extract_strided_slice %15 {offsets = [0, 64], sizes = [16, 32], strides = [1, 1]} : vector<16x128xbf16> to vector<16x32xbf16>
    %37 = vector.extract_strided_slice %15 {offsets = [0, 96], sizes = [16, 32], strides = [1, 1]} : vector<16x128xbf16> to vector<16x32xbf16>
    %38 = vector.shape_cast %34 : vector<16x32xbf16> to vector<1x16x32xbf16>
    %39 = vector.shape_cast %35 : vector<16x32xbf16> to vector<1x16x32xbf16>
    %40 = vector.shape_cast %36 : vector<16x32xbf16> to vector<1x16x32xbf16>
    %41 = vector.shape_cast %37 : vector<16x32xbf16> to vector<1x16x32xbf16>
    %42 = tpu.concatenate %38, %39, %40, %41 in 0 : vector<1x16x32xbf16>, vector<1x16x32xbf16>, vector<1x16x32xbf16>, vector<1x16x32xbf16> -> vector<4x16x32xbf16>
    "tpu.trace_start"() <{level = 10 : i32, message = "hqd,hkd->hqk"}> : () -> ()
    %cst_7 = arith.constant dense<0.000000e+00> : vector<4x16x16xf32>
    %43 = tpu.matmul %24, %33, %cst_7 {dimension_numbers = #tpu.dot_dimension_numbers<[2], [2], [1], [1], [0, 0, 0, 1, 1, 1], [0], [0]>} : vector<4x16x32xbf16>, vector<4x16x32xbf16>, vector<4x16x16xf32> -> vector<4x16x16xf32>
    "tpu.trace_stop"() : () -> ()
    %44 = tpu.iota {dimensions = array<i32: 0>} : vector<16x16xi32>
    %c2_i32 = arith.constant 2 : i32
    %c0_i32 = arith.constant 0 : i32
    %45 = arith.cmpi eq, %c2_i32, %c0_i32 : i32
    %c1_i32 = arith.constant 1 : i32
    %46 = arith.select %45, %c1_i32, %c2_i32 : i32
    %47 = vector.broadcast %46 : i32 to vector<16x16xi32>
    %48 = arith.remsi %44, %47 : vector<16x16xi32>
    %c0_i32_8 = arith.constant 0 : i32
    %49 = vector.broadcast %c0_i32_8 : i32 to vector<16x16xi32>
    %50 = arith.cmpi ne, %48, %49 : vector<16x16xi32>
    %c0_i32_9 = arith.constant 0 : i32
    %51 = vector.broadcast %c0_i32_9 : i32 to vector<16x16xi32>
    %52 = arith.cmpi slt, %48, %51 : vector<16x16xi32>
    %c0_i32_10 = arith.constant 0 : i32
    %53 = arith.cmpi slt, %46, %c0_i32_10 : i32
    %54 = vector.broadcast %53 : i1 to vector<16x16xi1>
    %55 = vector.broadcast %54 : vector<16x16xi1> to vector<16x16xi1>
    %56 = arith.xori %52, %55 : vector<16x16xi1>
    %57 = arith.andi %56, %50 : vector<16x16xi1>
    %58 = vector.broadcast %46 : i32 to vector<16x16xi32>
    %59 = arith.addi %48, %58 : vector<16x16xi32>
    %60 = arith.select %57, %59, %48 : vector<16x16xi1>, vector<16x16xi32>
    %61 = tpu.iota {dimensions = array<i32: 1>} : vector<16x16xi32>
    %c2_i32_11 = arith.constant 2 : i32
    %c0_i32_12 = arith.constant 0 : i32
    %62 = arith.cmpi eq, %c2_i32_11, %c0_i32_12 : i32
    %c1_i32_13 = arith.constant 1 : i32
    %63 = arith.select %62, %c1_i32_13, %c2_i32_11 : i32
    %64 = vector.broadcast %63 : i32 to vector<16x16xi32>
    %65 = arith.remsi %61, %64 : vector<16x16xi32>
    %c0_i32_14 = arith.constant 0 : i32
    %66 = vector.broadcast %c0_i32_14 : i32 to vector<16x16xi32>
    %67 = arith.cmpi ne, %65, %66 : vector<16x16xi32>
    %c0_i32_15 = arith.constant 0 : i32
    %68 = vector.broadcast %c0_i32_15 : i32 to vector<16x16xi32>
    %69 = arith.cmpi slt, %65, %68 : vector<16x16xi32>
    %c0_i32_16 = arith.constant 0 : i32
    %70 = arith.cmpi slt, %63, %c0_i32_16 : i32
    %71 = vector.broadcast %70 : i1 to vector<16x16xi1>
    %72 = vector.broadcast %71 : vector<16x16xi1> to vector<16x16xi1>
    %73 = arith.xori %69, %72 : vector<16x16xi1>
    %74 = arith.andi %73, %67 : vector<16x16xi1>
    %75 = vector.broadcast %63 : i32 to vector<16x16xi32>
    %76 = arith.addi %65, %75 : vector<16x16xi32>
    %77 = arith.select %74, %76, %65 : vector<16x16xi1>, vector<16x16xi32>
    %78 = arith.cmpi eq, %60, %77 : vector<16x16xi32>
    %79 = vector.shape_cast %78 : vector<16x16xi1> to vector<1x16x16xi1>
    %cst_17 = arith.constant -1.000000e+30 : f32
    %80 = vector.shape_cast %79 : vector<1x16x16xi1> to vector<1x16x16xi1>
    %81 = vector.broadcast %80 : vector<1x16x16xi1> to vector<4x16x16xi1>
    %82 = vector.broadcast %cst_17 : f32 to vector<4x16x16xf32>
    %83 = arith.select %81, %43, %82 : vector<4x16x16xi1>, vector<4x16x16xf32>
    %cst_18 = arith.constant dense<0xFF800000> : vector<4x16xf32>
    %84 = vector.multi_reduction <maximumf>, %83, %cst_18 [2] : vector<4x16x16xf32> to vector<4x16xf32>
    %85 = vector.shape_cast %84 : vector<4x16xf32> to vector<4x16x1xf32>
    %86 = vector.broadcast %85 : vector<4x16x1xf32> to vector<4x16x16xf32>
    %87 = arith.subf %83, %86 : vector<4x16x16xf32>
    %88 = math.exp %87 : vector<4x16x16xf32>
    %cst_19 = arith.constant dense<0.000000e+00> : vector<4x16xf32>
    %89 = vector.multi_reduction <add>, %88, %cst_19 [2] : vector<4x16x16xf32> to vector<4x16xf32>
    %90 = vector.shape_cast %89 : vector<4x16xf32> to vector<4x16x1xf32>
    %91 = tpu.reciprocal %90 {approx = true} : vector<4x16x1xf32> -> vector<4x16x1xf32>
    %92 = vector.broadcast %91 : vector<4x16x1xf32> to vector<4x16x16xf32>
    %93 = arith.mulf %88, %92 : vector<4x16x16xf32>
    %94 = arith.truncf %93 : vector<4x16x16xf32> to vector<4x16x16xbf16>
    "tpu.trace_start"() <{level = 10 : i32, message = "hqk,hkd->hqd"}> : () -> ()
    %cst_20 = arith.constant dense<0.000000e+00> : vector<4x16x32xf32>
    %95 = tpu.matmul %94, %42, %cst_20 {dimension_numbers = #tpu.dot_dimension_numbers<[2], [1], [1], [2], [0, 0, 0, 1, 1, 2], [0], [0]>} : vector<4x16x16xbf16>, vector<4x16x32xbf16>, vector<4x16x32xf32> -> vector<4x16x32xf32>
    "tpu.trace_stop"() : () -> ()
    %96 = arith.truncf %95 : vector<4x16x32xf32> to vector<4x16x32xbf16>
    %c0_21 = arith.constant 0 : index
    %c0_22 = arith.constant 0 : index
    %c0_23 = arith.constant 0 : index
    %97 = vector.load %arg4[%c0_21, %c0_22, %c0_23] : memref<4x32x128xbf16, #tpu.memory_space<vmem>>, vector<4x32x128xbf16>
    "tpu.trace_start"() <{level = 10 : i32, message = "hnd,hde->hne"}> : () -> ()
    %cst_24 = arith.constant dense<0.000000e+00> : vector<4x16x128xf32>
    %98 = tpu.matmul %96, %97, %cst_24 {dimension_numbers = #tpu.dot_dimension_numbers<[2], [1], [1], [2], [0, 0, 0, 1, 1, 2], [0], [0]>} : vector<4x16x32xbf16>, vector<4x32x128xbf16>, vector<4x16x128xf32> -> vector<4x16x128xf32>
    "tpu.trace_stop"() : () -> ()
    %cst_25 = arith.constant dense<0.000000e+00> : vector<16x128xf32>
    %99 = vector.multi_reduction <add>, %98, %cst_25 [0] : vector<4x16x128xf32> to vector<16x128xf32>
    %c0_26 = arith.constant 0 : index
    %c0_27 = arith.constant 0 : index
    %100 = vector.load %arg5[%c0_26, %c0_27] : memref<1x128xf32, #tpu.memory_space<vmem>>, vector<1x128xf32>
    %101 = vector.broadcast %100 : vector<1x128xf32> to vector<16x128xf32>
    %102 = arith.addf %99, %101 : vector<16x128xf32>
    %103 = arith.addf %1, %102 : vector<16x128xf32>
    %cst_28 = arith.constant dense<0.000000e+00> : vector<16xf32>
    %104 = vector.multi_reduction <add>, %103, %cst_28 [1] : vector<16x128xf32> to vector<16xf32>
    %105 = vector.shape_cast %104 : vector<16xf32> to vector<16x1xf32>
    %cst_29 = arith.constant 1.280000e+02 : f32
    %106 = vector.broadcast %cst_29 : f32 to vector<16x1xf32>
    %107 = arith.divf %105, %106 : vector<16x1xf32>
    %108 = vector.broadcast %107 : vector<16x1xf32> to vector<16x128xf32>
    %109 = arith.subf %103, %108 : vector<16x128xf32>
    %110 = arith.mulf %109, %109 : vector<16x128xf32>
    %cst_30 = arith.constant dense<0.000000e+00> : vector<16xf32>
    %111 = vector.multi_reduction <add>, %110, %cst_30 [1] : vector<16x128xf32> to vector<16xf32>
    %112 = vector.shape_cast %111 : vector<16xf32> to vector<16x1xf32>
    %cst_31 = arith.constant 1.280000e+02 : f32
    %113 = vector.broadcast %cst_31 : f32 to vector<16x1xf32>
    %114 = arith.divf %112, %113 : vector<16x1xf32>
    %115 = vector.broadcast %107 : vector<16x1xf32> to vector<16x128xf32>
    %116 = arith.subf %103, %115 : vector<16x128xf32>
    %cst_32 = arith.constant 9.99999974E-6 : f32
    %117 = vector.broadcast %cst_32 : f32 to vector<16x1xf32>
    %118 = arith.addf %114, %117 : vector<16x1xf32>
    %119 = math.rsqrt %118 : vector<16x1xf32>
    %120 = vector.broadcast %119 : vector<16x1xf32> to vector<16x128xf32>
    %121 = arith.mulf %116, %120 : vector<16x128xf32>
    %c0_33 = arith.constant 0 : index
    %c0_34 = arith.constant 0 : index
    %122 = vector.load %arg6[%c0_33, %c0_34] : memref<1x128xf32, #tpu.memory_space<vmem>>, vector<1x128xf32>
    %123 = vector.broadcast %122 : vector<1x128xf32> to vector<16x128xf32>
    %124 = arith.mulf %121, %123 : vector<16x128xf32>
    %c0_35 = arith.constant 0 : index
    %c0_36 = arith.constant 0 : index
    %125 = vector.load %arg7[%c0_35, %c0_36] : memref<1x128xf32, #tpu.memory_space<vmem>>, vector<1x128xf32>
    %126 = vector.broadcast %125 : vector<1x128xf32> to vector<16x128xf32>
    %127 = arith.addf %124, %126 : vector<16x128xf32>
    %128 = vector.shape_cast %127 : vector<16x128xf32> to vector<8x2x128xf32>
    %c0_37 = arith.constant 0 : index
    %c0_38 = arith.constant 0 : index
    %c0_39 = arith.constant 0 : index
    %129 = vector.load %arg8[%c0_37, %c0_38, %c0_39] : memref<8x2x128xf32, #tpu.memory_space<vmem>>, vector<8x2x128xf32>
    tpu.vector_store %arg8[%c0_37, %c0_38, %c0_39], %128 {strides = array<i32>} : memref<8x2x128xf32, #tpu.memory_space<vmem>>, vector<8x2x128xf32>,
    return
  }
  func.func @transform_0(%arg0: i32) -> (i32, i32, i32) {
    %c0_i32 = arith.constant 0 : i32
    %c0_i32_0 = arith.constant 0 : i32
    %c0_i32_1 = arith.constant 0 : i32
    return %c0_i32, %arg0, %c0_i32_0 : i32, i32, i32
  }
  func.func @transform_1(%arg0: i32) -> (i32, i32) {
    %c0_i32 = arith.constant 0 : i32
    %c0_i32_0 = arith.constant 0 : i32
    %c0_i32_1 = arith.constant 0 : i32
    return %c0_i32, %c0_i32_0 : i32, i32
  }
  func.func @transform_2(%arg0: i32) -> (i32, i32) {
    %c0_i32 = arith.constant 0 : i32
    %c0_i32_0 = arith.constant 0 : i32
    %c0_i32_1 = arith.constant 0 : i32
    return %c0_i32, %c0_i32_0 : i32, i32
  }
  func.func @transform_3(%arg0: i32) -> (i32, i32, i32) {
    %c0_i32 = arith.constant 0 : i32
    %c0_i32_0 = arith.constant 0 : i32
    %c0_i32_1 = arith.constant 0 : i32
    %c0_i32_2 = arith.constant 0 : i32
    return %c0_i32, %c0_i32_0, %c0_i32_1 : i32, i32, i32
  }
  func.func @transform_4(%arg0: i32) -> (i32, i32) {
    %c0_i32 = arith.constant 0 : i32
    %c0_i32_0 = arith.constant 0 : i32
    %c0_i32_1 = arith.constant 0 : i32
    return %c0_i32, %c0_i32_0 : i32, i32
  }
  func.func @transform_5(%arg0: i32) -> (i32, i32) {
    %c0_i32 = arith.constant 0 : i32
    %c0_i32_0 = arith.constant 0 : i32
    %c0_i32_1 = arith.constant 0 : i32
    return %c0_i32, %c0_i32_0 : i32, i32
  }
  func.func @transform_6(%arg0: i32) -> (i32, i32) {
    %c0_i32 = arith.constant 0 : i32
    %c0_i32_0 = arith.constant 0 : i32
    %c0_i32_1 = arith.constant 0 : i32
    return %c0_i32, %c0_i32_0 : i32, i32
  }
  func.func @transform_7(%arg0: i32) -> (i32, i32, i32) {
    %c0_i32 = arith.constant 0 : i32
    %c0_i32_0 = arith.constant 0 : i32
    %c0_i32_1 = arith.constant 0 : i32
    return %c0_i32, %arg0, %c0_i32_0 : i32, i32, i32
  }
}

</mosaic_0001>

<llo_original>
// kernel: tpu_custom_call.1
$region0: #{tpu_custom_call.1}
  #allocation0 [shape = 'u32[]', space=smem, size = 0x4, offset = 0x4, fixed_abs, tag = 'smem constant byte address 0x4 - core index']
  #allocation1 [shape = 'u32[72,128]{1,0:T(1,128)}', space=vmem, size = 0x9000, scoped, tag = 'internal scratch']
  %s0 = inlined_call_operand.hbm [shape: f32[8,2,128], index: 0, kind: input, shape index: {}]
  %s1 = inlined_call_operand.hbm [shape: bf16[128,384], index: 1, kind: input, shape index: {}]
  %s2 = inlined_call_operand.hbm [shape: f32[1,384], index: 2, kind: input, shape index: {}]
  %s3 = inlined_call_operand.hbm [shape: bf16[4,32,128], index: 3, kind: input, shape index: {}]
  %s4 = inlined_call_operand.vmem [shape: f32[1,128], index: 4, kind: input, shape index: {}]
  %s5 = inlined_call_operand.vmem [shape: f32[1,128], index: 5, kind: input, shape index: {}]
  %s6 = inlined_call_operand.vmem [shape: f32[1,128], index: 6, kind: input, shape index: {}]
  %s7 = inlined_call_operand.hbm [shape: f32[8,2,128], index: 7, kind: output, shape index: {}]
  %s8 = sld [smem:[#allocation0]]
  $region54: #{tpu_custom_call.1} parent=0
    _
  %s10 = ssub.s32 1, %s8
  %s11 = scalar_select 0, %s10, %s8
  $region1: #{tpu_custom_call.1} parent=0
    #allocation2 [shape = 'u8[8192]{0}', space=vmem, size = 0x2000, scoped, tag = 'input window, operand 0, single buffered']
    #allocation3 [shape = 's32[1]{0}', space=sflag, size = 0x4, scoped, tag = 'scoped memory for tpu_custom_call.1']
    #allocation4 [shape = 's32[1]{0}', space=sflag, size = 0x4, scoped, tag = 'scoped memory for tpu_custom_call.1']
    #allocation5 [shape = 'u8[98304]{0}', space=vmem, size = 0x18000, scoped, tag = 'input window, operand 1, single buffered']
    #allocation6 [shape = 's32[1]{0}', space=sflag, size = 0x4, scoped, tag = 'scoped memory for tpu_custom_call.1']
    #allocation7 [shape = 'u8[1536]{0}', space=vmem, size = 0x800, scoped, tag = 'input window, operand 2, single buffered']
    #allocation8 [shape = 'u8[32768]{0}', space=vmem, size = 0x8000, scoped, tag = 'input window, operand 3, single buffered']
    #allocation9 [shape = 's32[1]{0}', space=sflag, size = 0x4, scoped, tag = 'scoped memory for tpu_custom_call.1']
    #allocation10 [shape = 'u8[8192]{0}', space=vmem, size = 0x2000, scoped, tag = 'output window, operand 0, single buffered']
    %12 = vsyncpa [#allocation3], 0
    %13 = vsyncpa [#allocation6], 0
    %14 = vsyncpa [#allocation9], 0
    %15 = vsyncpa [#allocation4], 0
    // Predicated region
    $region2: #{tpu_custom_call.1} parent=1 // pred_check
      _
    $region3: #{tpu_custom_call.1} parent=1 // pred_check_branch
      %17 = sbr.rel (0) target = $region5
    $region4: #{tpu_custom_call.1} parent=1 // pred_region
      %19 = vsyncadd [#allocation3], 0
      %s20 = sshll.u32 %s0, 4
      %s21 = int_to_ptr.hbm [resolvable:$true] %s20
      %s22 = sshll.u32 [#allocation2], 4
      %s23 = int_to_ptr.vmem [resolvable:$true] %s22
      %28 = dma.hbm_to_vmem [thread:$0]  %s21, 256, %s23, [#allocation3], 32, 32, 2
    $region5: #{tpu_custom_call.1} parent=1 // pred_fallthru
      _
    // Predicated region
    $region6: #{tpu_custom_call.1} parent=1 // pred_check
      _
    $region7: #{tpu_custom_call.1} parent=1 // pred_check_branch
      %30 = sbr.rel (0) target = $region9
    $region8: #{tpu_custom_call.1} parent=1 // pred_region
      %32 = vsyncadd [#allocation6], 0
      %s33 = sshll.u32 %s1, 4
      %s34 = int_to_ptr.hbm [resolvable:$true] %s33
      %s35 = sshll.u32 [#allocation5], 4
      %s36 = int_to_ptr.vmem [resolvable:$true] %s35
      %41 = dma.hbm_to_vmem [thread:$0]  %s34, 3072, %s36, [#allocation6], 192, 192, 12
    $region9: #{tpu_custom_call.1} parent=1 // pred_fallthru
      _
    // Predicated region
    $region10: #{tpu_custom_call.1} parent=1 // pred_check
      _
    $region11: #{tpu_custom_call.1} parent=1 // pred_check_branch
      %43 = sbr.rel (0) target = $region13
    $region12: #{tpu_custom_call.1} parent=1 // pred_region
      %45 = vsyncadd [#allocation6], 0
      %s47 = sshll.u32 %s2, 4
      %s48 = int_to_ptr.hbm [resolvable:$true] %s47
      %s49 = sshll.u32 [#allocation7], 4
      %s50 = int_to_ptr.vmem [resolvable:$true] %s49
      %52 = dma.hbm_to_vmem [thread:$0]  %s48, 48, %s50, [#allocation6]
    $region13: #{tpu_custom_call.1} parent=1 // pred_fallthru
      _
    // Predicated region
    $region14: #{tpu_custom_call.1} parent=1 // pred_check
      _
    $region15: #{tpu_custom_call.1} parent=1 // pred_check_branch
      %54 = sbr.rel (0) target = $region17
    $region16: #{tpu_custom_call.1} parent=1 // pred_region
      %56 = vsyncadd [#allocation9], 0
      %s57 = sshll.u32 %s3, 4
      %s58 = int_to_ptr.hbm [resolvable:$true] %s57
      %s59 = sshll.u32 [#allocation8], 4
      %s60 = int_to_ptr.vmem [resolvable:$true] %s59
      %65 = dma.hbm_to_vmem [thread:$0]  %s58, 1024, %s60, [#allocation9], 64, 64, 4
    $region17: #{tpu_custom_call.1} parent=1 // pred_fallthru
      _
    // Predicated region
    $region18: #{tpu_custom_call.1} parent=1 // pred_check
      _
    $region19: #{tpu_custom_call.1} parent=1 // pred_check_branch
      %67 = sbr.rel (0) target = $region21
    $region20: #{tpu_custom_call.1} parent=1 // pred_region
      _
    $region21: #{tpu_custom_call.1} parent=1 // pred_fallthru
      _
    // Predicated region
    $region22: #{tpu_custom_call.1} parent=1 // pred_check
      _
    $region23: #{tpu_custom_call.1} parent=1 // pred_check_branch
      %69 = sbr.rel (0) target = $region25
    $region24: #{tpu_custom_call.1} parent=1 // pred_region
      _
    $region25: #{tpu_custom_call.1} parent=1 // pred_fallthru
      _
    // Predicated region
    $region26: #{tpu_custom_call.1} parent=1 // pred_check
      _
    $region27: #{tpu_custom_call.1} parent=1 // pred_check_branch
      %71 = sbr.rel (0) target = $region29
    $region28: #{tpu_custom_call.1} parent=1 // pred_region
      _
    $region29: #{tpu_custom_call.1} parent=1 // pred_fallthru
      _
    // Predicated region
    $region30: #{tpu_custom_call.1} parent=1 // pred_check
      _
    $region31: #{tpu_custom_call.1} parent=1 // pred_check_branch
      %73 = sbr.rel (0) target = $region33
    $region32: #{tpu_custom_call.1} parent=1 // pred_region
      %75 = dma.done [#allocation3], 256
    $region33: #{tpu_custom_call.1} parent=1 // pred_fallthru
      _
    // Predicated region
    $region34: #{tpu_custom_call.1} parent=1 // pred_check
      _
    $region35: #{tpu_custom_call.1} parent=1 // pred_check_branch
      %77 = sbr.rel (0) target = $region37
    $region36: #{tpu_custom_call.1} parent=1 // pred_region
      %79 = dma.done [#allocation6], 3072
    $region37: #{tpu_custom_call.1} parent=1 // pred_fallthru
      _
    // Predicated region
    $region38: #{tpu_custom_call.1} parent=1 // pred_check
      _
    $region39: #{tpu_custom_call.1} parent=1 // pred_check_branch
      %81 = sbr.rel (0) target = $region41
    $region40: #{tpu_custom_call.1} parent=1 // pred_region
      %83 = dma.done [#allocation6], 48
    $region41: #{tpu_custom_call.1} parent=1 // pred_fallthru
      _
    // Predicated region
    $region42: #{tpu_custom_call.1} parent=1 // pred_check
      _
    $region43: #{tpu_custom_call.1} parent=1 // pred_check_branch
      %85 = sbr.rel (0) target = $region45
    $region44: #{tpu_custom_call.1} parent=1 // pred_region
      %87 = dma.done [#allocation9], 1024
    $region45: #{tpu_custom_call.1} parent=1 // pred_fallthru
      _
    %v89 = vld [vmem:[#allocation2] sm:$0x3]
    %v90 = vld [vmem:[#allocation2 + $0x2] sm:$0x3]
    %v91 = vld [vmem:[#allocation2 + $0x4] sm:$0x3]
    %v92 = vld [vmem:[#allocation2 + $0x6] sm:$0x3]
    %v93 = vld [vmem:[#allocation2 + $0x8] sm:$0x3]
    %v94 = vld [vmem:[#allocation2 + $0xa] sm:$0x3]
    %v95 = vld [vmem:[#allocation2 + $0xc] sm:$0x3]
    %v96 = vld [vmem:[#allocation2 + $0xe] sm:$0x3]
    %105 = vst [vmem:[#allocation1] ss:$4 sm:$0xff] %v89
    %s106 = scalar_lea.vmem [#allocation1], 1
    %107 = vst [vmem:[%s106] ss:$4 sm:$0xff] %v90
    %s108 = scalar_lea.vmem [#allocation1], 2
    %109 = vst [vmem:[%s108] ss:$4 sm:$0xff] %v91
    %s110 = scalar_lea.vmem [#allocation1], 3
    %111 = vst [vmem:[%s110] ss:$4 sm:$0xff] %v92
    %s112 = scalar_lea.vmem [#allocation1], 32
    %113 = vst [vmem:[%s112] ss:$4 sm:$0xff] %v93
    %s114 = scalar_lea.vmem [#allocation1], 33
    %115 = vst [vmem:[%s114] ss:$4 sm:$0xff] %v94
    %s116 = scalar_lea.vmem [#allocation1], 34
    %117 = vst [vmem:[%s116] ss:$4 sm:$0xff] %v95
    %s118 = scalar_lea.vmem [#allocation1], 35
    %119 = vst [vmem:[%s118] ss:$4 sm:$0xff] %v96
    %v120 = vld.sshfl [vmem:[#allocation1] sm:$0xff pattern:$0x73625140]
    %v121 = vld.sshfl [vmem:[#allocation1 + $0x20] sm:$0xff pattern:$0x73625140]
    %v124 = vpack.c.bf16 %v121, %v120
    %v125 = vld [vmem:[#allocation5] sm:$0xff]
    %v126 = vld [vmem:[#allocation5 + $0x8] sm:$0xf]
    %v127 = vld [vmem:[#allocation5 + $0xc] sm:$0xff]
    %v128 = vld [vmem:[#allocation5 + $0x14] sm:$0xf]
    %v129 = vld [vmem:[#allocation5 + $0x18] sm:$0xff]
    %v130 = vld [vmem:[#allocation5 + $0x20] sm:$0xf]
    %v131 = vld [vmem:[#allocation5 + $0x24] sm:$0xff]
    %v132 = vld [vmem:[#allocation5 + $0x2c] sm:$0xf]
    %v133 = vld [vmem:[#allocation5 + $0x30] sm:$0xff]
    %v134 = vld [vmem:[#allocation5 + $0x38] sm:$0xf]
    %v135 = vld [vmem:[#allocation5 + $0x3c] sm:$0xff]
    %v136 = vld [vmem:[#allocation5 + $0x44] sm:$0xf]
    %v137 = vld [vmem:[#allocation5 + $0x48] sm:$0xff]
    %v138 = vld [vmem:[#allocation5 + $0x50] sm:$0xf]
    %v139 = vld [vmem:[#allocation5 + $0x54] sm:$0xff]
    %v140 = vld [vmem:[#allocation5 + $0x5c] sm:$0xf]
    %v141 = vld [vmem:[#allocation5 + $0x60] sm:$0xff]
    %v142 = vld [vmem:[#allocation5 + $0x68] sm:$0xf]
    %v143 = vld [vmem:[#allocation5 + $0x6c] sm:$0xff]
    %v144 = vld [vmem:[#allocation5 + $0x74] sm:$0xf]
    %v145 = vld [vmem:[#allocation5 + $0x78] sm:$0xff]
    %v146 = vld [vmem:[#allocation5 + $0x80] sm:$0xf]
    %v147 = vld [vmem:[#allocation5 + $0x84] sm:$0xff]
    %v148 = vld [vmem:[#allocation5 + $0x8c] sm:$0xf]
    %v149 = vld [vmem:[#allocation5 + $0x90] sm:$0xff]
    %v150 = vld [vmem:[#allocation5 + $0x98] sm:$0xf]
    %v151 = vld [vmem:[#allocation5 + $0x9c] sm:$0xff]
    %v152 = vld [vmem:[#allocation5 + $0xa4] sm:$0xf]
    %v153 = vld [vmem:[#allocation5 + $0xa8] sm:$0xff]
    %v154 = vld [vmem:[#allocation5 + $0xb0] sm:$0xf]
    %v155 = vld [vmem:[#allocation5 + $0xb4] sm:$0xff]
    %v156 = vld [vmem:[#allocation5 + $0xbc] sm:$0xf]
    %v157 = vld [vmem:[#allocation7] sm:$0x7]
    %v159 = vperm.slane %v157, 0
    %v160 = vperm.slane %v157, 1
    %v161 = vperm.slane %v157, 2
    %v197 = vunpack.c.l.b16 %v125
    %v198 = vunpack.c.h.b16 %v125
    %v199 = vunpack.c.l.b16 %v126
    %v200 = vunpack.c.l.b16 %v127
    %v201 = vunpack.c.h.b16 %v127
    %v202 = vunpack.c.l.b16 %v128
    %v203 = vunpack.c.l.b16 %v129
    %v204 = vunpack.c.h.b16 %v129
    %v205 = vunpack.c.l.b16 %v130
    %v206 = vunpack.c.l.b16 %v131
    %v207 = vunpack.c.h.b16 %v131
    %v208 = vunpack.c.l.b16 %v132
    %v209 = vunpack.c.l.b16 %v133
    %v210 = vunpack.c.h.b16 %v133
    %v211 = vunpack.c.l.b16 %v134
    %v212 = vunpack.c.l.b16 %v135
    %v213 = vunpack.c.h.b16 %v135
    %v214 = vunpack.c.l.b16 %v136
    %v215 = vunpack.c.l.b16 %v137
    %v216 = vunpack.c.h.b16 %v137
    %v217 = vunpack.c.l.b16 %v138
    %v218 = vunpack.c.l.b16 %v139
    %v219 = vunpack.c.h.b16 %v139
    %v220 = vunpack.c.l.b16 %v140
    %v221 = vunpack.c.l.b16 %v141
    %v222 = vunpack.c.h.b16 %v141
    %v223 = vunpack.c.l.b16 %v142
    %v224 = vunpack.c.l.b16 %v143
    %v225 = vunpack.c.h.b16 %v143
    %v226 = vunpack.c.l.b16 %v144
    %v227 = vunpack.c.l.b16 %v145
    %v228 = vunpack.c.h.b16 %v145
    %v229 = vunpack.c.l.b16 %v146
    %v230 = vunpack.c.l.b16 %v147
    %v231 = vunpack.c.h.b16 %v147
    %v232 = vunpack.c.l.b16 %v148
    %v233 = vunpack.c.l.b16 %v149
    %v234 = vunpack.c.h.b16 %v149
    %v235 = vunpack.c.l.b16 %v150
    %v236 = vunpack.c.l.b16 %v151
    %v237 = vunpack.c.h.b16 %v151
    %v238 = vunpack.c.l.b16 %v152
    %v239 = vunpack.c.l.b16 %v153
    %v240 = vunpack.c.h.b16 %v153
    %v241 = vunpack.c.l.b16 %v154
    %v242 = vunpack.c.l.b16 %v155
    %v243 = vunpack.c.h.b16 %v155
    %v244 = vunpack.c.l.b16 %v156
    %v245 = vpack.c.b16 %v200, %v197
    %v246 = vpack.c.b16 %v201, %v198
    %v247 = vpack.c.b16 %v202, %v199
    %v248 = vpack.c.b16 %v206, %v203
    %v249 = vpack.c.b16 %v207, %v204
    %v250 = vpack.c.b16 %v208, %v205
    %v251 = vpack.c.b16 %v212, %v209
    %v252 = vpack.c.b16 %v213, %v210
    %v253 = vpack.c.b16 %v214, %v211
    %v254 = vpack.c.b16 %v218, %v215
    %v255 = vpack.c.b16 %v219, %v216
    %v256 = vpack.c.b16 %v220, %v217
    %v257 = vpack.c.b16 %v224, %v221
    %v258 = vpack.c.b16 %v225, %v222
    %v259 = vpack.c.b16 %v226, %v223
    %v260 = vpack.c.b16 %v230, %v227
    %v261 = vpack.c.b16 %v231, %v228
    %v262 = vpack.c.b16 %v232, %v229
    %v263 = vpack.c.b16 %v236, %v233
    %v264 = vpack.c.b16 %v237, %v234
    %v265 = vpack.c.b16 %v238, %v235
    %v266 = vpack.c.b16 %v242, %v239
    %v267 = vpack.c.b16 %v243, %v240
    %v268 = vpack.c.b16 %v244, %v241
    %293 = vmatpush.bf16.msra.mxu0 %v266
    %294 = vmatpush.bf16.msra.mxu0 %v263
    %295 = vmatpush.bf16.msra.mxu0 %v260
    %296 = vmatpush.bf16.msra.mxu0 %v257
    %297 = vmatpush.bf16.msra.mxu0 %v254
    %298 = vmatpush.bf16.msra.mxu0 %v251
    %299 = vmatpush.bf16.msra.mxu0 %v248
    %300 = vmatpush.bf16.msra.mxu0 %v245
    %301 = vmatmul.bf16.gmra.mxu0 %v124
    %v302 = vpop.f32.mrf.mxu0
    %v303 = vadd.f32 %v159, %v302
    %v304 = vpop.f32.mrf.mxu0
    %v305 = vadd.f32 %v159, %v304
    %306 = vdwg.mxu0
    %307 = vmatpush.bf16.msra.mxu0 %v267
    %308 = vmatpush.bf16.msra.mxu0 %v264
    %309 = vmatpush.bf16.msra.mxu0 %v261
    %310 = vmatpush.bf16.msra.mxu0 %v258
    %311 = vmatpush.bf16.msra.mxu0 %v255
    %312 = vmatpush.bf16.msra.mxu0 %v252
    %313 = vmatpush.bf16.msra.mxu0 %v249
    %314 = vmatpush.bf16.msra.mxu0 %v246
    %315 = vmatmul.bf16.gmra.mxu0 %v124
    %v316 = vpop.f32.mrf.mxu0
    %v317 = vadd.f32 %v160, %v316
    %v318 = vpop.f32.mrf.mxu0
    %v319 = vadd.f32 %v160, %v318
    %320 = vdwg.mxu0
    %321 = vmatpush.bf16.msra.mxu0 %v268
    %322 = vmatpush.bf16.msra.mxu0 %v265
    %323 = vmatpush.bf16.msra.mxu0 %v262
    %324 = vmatpush.bf16.msra.mxu0 %v259
    %325 = vmatpush.bf16.msra.mxu0 %v256
    %326 = vmatpush.bf16.msra.mxu0 %v253
    %327 = vmatpush.bf16.msra.mxu0 %v250
    %328 = vmatpush.bf16.msra.mxu0 %v247
    %329 = vmatmul.bf16.gmra.mxu0 %v124
    %v330 = vpop.f32.mrf.mxu0
    %v331 = vadd.f32 %v161, %v330
    %v332 = vpop.f32.mrf.mxu0
    %v333 = vadd.f32 %v161, %v332
    %334 = vdwg.mxu0
    %v335 = vmul.f32 %v303, 0.17677669
    %v336 = vmul.f32 %v305, 0.17677669
    %v337 = vpack.c.bf16 %v335, %v335
    %v338 = vpack.c.bf16 %v336, %v336
    %v339 = vpack.c.bf16 %v317, %v317
    %v340 = vpack.c.bf16 %v319, %v319
    %v341 = vpack.c.bf16 %v331, %v331
    %v342 = vpack.c.bf16 %v333, %v333
    %345 = vrot.lane.b32.xlu0 %v337, 96
    %v346 = vpop.permute.xlu0 %345
    %347 = vrot.lane.b32.xlu0 %v338, 96
    %v348 = vpop.permute.xlu0 %347
    %349 = vrot.lane.b32.xlu0 %v337, 64
    %v350 = vpop.permute.xlu0 %349
    %351 = vrot.lane.b32.xlu0 %v338, 64
    %v352 = vpop.permute.xlu0 %351
    %353 = vrot.lane.b32.xlu0 %v337, 32
    %v354 = vpop.permute.xlu0 %353
    %355 = vrot.lane.b32.xlu0 %v338, 32
    %v356 = vpop.permute.xlu0 %355
    %359 = vrot.lane.b32.xlu0 %v339, 96
    %v360 = vpop.permute.xlu0 %359
    %361 = vrot.lane.b32.xlu0 %v340, 96
    %v362 = vpop.permute.xlu0 %361
    %363 = vrot.lane.b32.xlu0 %v339, 64
    %v364 = vpop.permute.xlu0 %363
    %365 = vrot.lane.b32.xlu0 %v340, 64
    %v366 = vpop.permute.xlu0 %365
    %367 = vrot.lane.b32.xlu0 %v339, 32
    %v368 = vpop.permute.xlu0 %367
    %369 = vrot.lane.b32.xlu0 %v340, 32
    %v370 = vpop.permute.xlu0 %369
    %373 = vrot.lane.b32.xlu0 %v341, 96
    %v374 = vpop.permute.xlu0 %373
    %375 = vrot.lane.b32.xlu0 %v342, 96
    %v376 = vpop.permute.xlu0 %375
    %377 = vrot.lane.b32.xlu0 %v341, 64
    %v378 = vpop.permute.xlu0 %377
    %379 = vrot.lane.b32.xlu0 %v342, 64
    %v380 = vpop.permute.xlu0 %379
    %381 = vrot.lane.b32.xlu0 %v341, 32
    %v382 = vpop.permute.xlu0 %381
    %383 = vrot.lane.b32.xlu0 %v342, 32
    %v384 = vpop.permute.xlu0 %383
    %v385 = vunpack.c.l.b16 %v337
    %v386 = vunpack.c.l.b16 %v338
    %v387 = vpack.c.b16 %v386, %v385
    %v388 = vunpack.c.l.b16 %v339
    %v389 = vunpack.c.l.b16 %v340
    %v390 = vpack.c.b16 %v389, %v388
    %vm391 = vcmask 261120
    %v393 = vsel %vm391, %v387, 0
    %v396 = vsel %vm391, %v390, 0
    %398 = vmatpush.bf16.xpose.msra.mxu0 0
    %399 = vmatpush.bf16.xpose.msra.mxu0 0
    %400 = vmatpush.bf16.xpose.msra.mxu0 0
    %401 = vmatpush.bf16.xpose.msra.mxu0 0
    %402 = vmatpush.bf16.xpose.msra.mxu0 0
    %403 = vmatpush.bf16.xpose.msra.mxu0 0
    %404 = vmatpush.bf16.xpose.msra.mxu0 0
    %405 = vmatpush.bf16.xpose.msra.mxu0 %v396
    %406 = vmatmul.bf16.gmra.mxu0 %v393
    %v407 = vpop.f32.mrf.mxu0
    %v408 = vadd.f32 0.0, %v407
    %v409 = vpop.f32.mrf.mxu0
    %v410 = vadd.f32 0.0, %v409
    %411 = vdwg.mxu0
    %v412 = vunpack.c.l.b16 %v346
    %v413 = vunpack.c.l.b16 %v348
    %v414 = vpack.c.b16 %v413, %v412
    %v415 = vunpack.c.l.b16 %v360
    %v416 = vunpack.c.l.b16 %v362
    %v417 = vpack.c.b16 %v416, %v415
    %v419 = vsel %vm391, %v414, 0
    %v422 = vsel %vm391, %v417, 0
    %424 = vmatpush.bf16.xpose.msra.mxu0 0
    %425 = vmatpush.bf16.xpose.msra.mxu0 0
    %426 = vmatpush.bf16.xpose.msra.mxu0 0
    %427 = vmatpush.bf16.xpose.msra.mxu0 0
    %428 = vmatpush.bf16.xpose.msra.mxu0 0
    %429 = vmatpush.bf16.xpose.msra.mxu0 0
    %430 = vmatpush.bf16.xpose.msra.mxu0 0
    %431 = vmatpush.bf16.xpose.msra.mxu0 %v422
    %432 = vmatmul.bf16.gmra.mxu0 %v419
    %v433 = vpop.f32.mrf.mxu0
    %v434 = vadd.f32 0.0, %v433
    %v435 = vpop.f32.mrf.mxu0
    %v436 = vadd.f32 0.0, %v435
    %437 = vdwg.mxu0
    %v438 = vunpack.c.l.b16 %v350
    %v439 = vunpack.c.l.b16 %v352
    %v440 = vpack.c.b16 %v439, %v438
    %v441 = vunpack.c.l.b16 %v364
    %v442 = vunpack.c.l.b16 %v366
    %v443 = vpack.c.b16 %v442, %v441
    %v445 = vsel %vm391, %v440, 0
    %v448 = vsel %vm391, %v443, 0
    %450 = vmatpush.bf16.xpose.msra.mxu0 0
    %451 = vmatpush.bf16.xpose.msra.mxu0 0
    %452 = vmatpush.bf16.xpose.msra.mxu0 0
    %453 = vmatpush.bf16.xpose.msra.mxu0 0
    %454 = vmatpush.bf16.xpose.msra.mxu0 0
    %455 = vmatpush.bf16.xpose.msra.mxu0 0
    %456 = vmatpush.bf16.xpose.msra.mxu0 0
    %457 = vmatpush.bf16.xpose.msra.mxu0 %v448
    %458 = vmatmul.bf16.gmra.mxu0 %v445
    %v459 = vpop.f32.mrf.mxu0
    %v460 = vadd.f32 0.0, %v459
    %v461 = vpop.f32.mrf.mxu0
    %v462 = vadd.f32 0.0, %v461
    %463 = vdwg.mxu0
    %v464 = vunpack.c.l.b16 %v354
    %v465 = vunpack.c.l.b16 %v356
    %v466 = vpack.c.b16 %v465, %v464
    %v467 = vunpack.c.l.b16 %v368
    %v468 = vunpack.c.l.b16 %v370
    %v469 = vpack.c.b16 %v468, %v467
    %v471 = vsel %vm391, %v466, 0
    %v474 = vsel %vm391, %v469, 0
    %476 = vmatpush.bf16.xpose.msra.mxu0 0
    %477 = vmatpush.bf16.xpose.msra.mxu0 0
    %478 = vmatpush.bf16.xpose.msra.mxu0 0
    %479 = vmatpush.bf16.xpose.msra.mxu0 0
    %480 = vmatpush.bf16.xpose.msra.mxu0 0
    %481 = vmatpush.bf16.xpose.msra.mxu0 0
    %482 = vmatpush.bf16.xpose.msra.mxu0 0
    %483 = vmatpush.bf16.xpose.msra.mxu0 %v474
    %484 = vmatmul.bf16.gmra.mxu0 %v471
    %v485 = vpop.f32.mrf.mxu0
    %v486 = vadd.f32 0.0, %v485
    %v487 = vpop.f32.mrf.mxu0
    %v488 = vadd.f32 0.0, %v487
    %489 = vdwg.mxu0
    %v490 = vlaneseq
    %v491 = vshrl.u32 %v490, 7
    %v492 = vadd.s32 %v491, 8
    %vm493 = vcmp.lt.s32.totalorder %v491, 0
    %v494 = vsub.s32 0, %v491
    %v495 = vsel %vm493, %v494, %v491
    %v496 = vshrl.u32 %v495, 1
    %v497 = vand.u32 %v495, 1
    %v498 = vsub.s32 0, %v497
    %v499 = vsel %vm493, %v498, %v497
    %vm500 = vcmp.lt.s32.totalorder %v492, 0
    %v501 = vsub.s32 0, %v492
    %v502 = vsel %vm500, %v501, %v492
    %v503 = vshrl.u32 %v502, 1
    %v504 = vand.u32 %v502, 1
    %v505 = vsub.s32 0, %v504
    %v506 = vsel %vm500, %v505, %v504
    %vm507 = vcmp.ne.s32.totalorder %v499, 0
    %vm508 = vcmp.ne.s32.totalorder %v506, 0
    %vm509 = vcmp.lt.s32.totalorder %v499, 0
    %vm510 = vcmp.lt.s32.totalorder %v506, 0
    %vm511 = vmand %vm509, %vm507
    %vm512 = vmand %vm510, %vm508
    %v513 = vadd.s32 %v499, 2
    %v514 = vadd.s32 %v506, 2
    %v515 = vsel %vm511, %v513, %v499
    %v516 = vsel %vm512, %v514, %v506
    %v517 = vlaneseq
    %v518 = vand.u32 %v517, 127
    %vm519 = vcmp.lt.s32.totalorder %v518, 0
    %v520 = vsub.s32 0, %v518
    %v521 = vsel %vm519, %v520, %v518
    %v522 = vshrl.u32 %v521, 1
    %v523 = vand.u32 %v521, 1
    %v524 = vsub.s32 0, %v523
    %v525 = vsel %vm519, %v524, %v523
    %vm526 = vcmp.ne.s32.totalorder %v525, 0
    %vm527 = vcmp.lt.s32.totalorder %v525, 0
    %vm528 = vmand %vm527, %vm526
    %v529 = vadd.s32 %v525, 2
    %v530 = vsel %vm528, %v529, %v525
    %vm531 = vcmp.eq.s32.totalorder %v515, %v530
    %vm532 = vcmp.eq.s32.totalorder %v516, %v530
    %v533 = vsel %vm531, 1, 0
    %v534 = vsel %vm532, 1, 0
    %vm535 = vcmp.eq.s32.totalorder %v533, 1
    %vm536 = vcmp.eq.s32.totalorder %v534, 1
    %v537 = vsel %vm535, %v408, -1e+30
    %v538 = vsel %vm536, %v410, -1e+30
    %v539 = vsel %vm535, %v434, -1e+30
    %v540 = vsel %vm536, %v436, -1e+30
    %v541 = vsel %vm535, %v460, -1e+30
    %v542 = vsel %vm536, %v462, -1e+30
    %v543 = vsel %vm535, %v486, -1e+30
    %v544 = vsel %vm536, %v488, -1e+30
    %vm545 = vcmask 130048
    %v546 = vsel %vm545, %v537, -inf
    %547 = vmax.xlane.f32.xlu0 %v546
    %v548 = vpop.xlane.xlu0 %547
    %v549 = vsel %vm545, %v538, -inf
    %550 = vmax.xlane.f32.xlu0 %v549
    %v551 = vpop.xlane.xlu0 %550
    %v552 = vsel %vm545, %v539, -inf
    %553 = vmax.xlane.f32.xlu0 %v552
    %v554 = vpop.xlane.xlu0 %553
    %v555 = vsel %vm545, %v540, -inf
    %556 = vmax.xlane.f32.xlu0 %v555
    %v557 = vpop.xlane.xlu0 %556
    %v558 = vsel %vm545, %v541, -inf
    %559 = vmax.xlane.f32.xlu0 %v558
    %v560 = vpop.xlane.xlu0 %559
    %v561 = vsel %vm545, %v542, -inf
    %562 = vmax.xlane.f32.xlu0 %v561
    %v563 = vpop.xlane.xlu0 %562
    %v564 = vsel %vm545, %v543, -inf
    %565 = vmax.xlane.f32.xlu0 %v564
    %v566 = vpop.xlane.xlu0 %565
    %v567 = vsel %vm545, %v544, -inf
    %568 = vmax.xlane.f32.xlu0 %v567
    %v569 = vpop.xlane.xlu0 %568
    %v570 = vsub.f32 %v537, %v548
    %v571 = vsub.f32 %v538, %v551
    %v572 = vsub.f32 %v539, %v554
    %v573 = vsub.f32 %v540, %v557
    %v574 = vsub.f32 %v541, %v560
    %v575 = vsub.f32 %v542, %v563
    %v576 = vsub.f32 %v543, %v566
    %v577 = vsub.f32 %v544, %v569
    %v578 = vmul.f32 %v570, 1.442695
    %v579 = vpow.pop %v578
    %v580 = vmul.f32 %v571, 1.442695
    %v581 = vpow.pop %v580
    %v582 = vmul.f32 %v572, 1.442695
    %v583 = vpow.pop %v582
    %v584 = vmul.f32 %v573, 1.442695
    %v585 = vpow.pop %v584
    %v586 = vmul.f32 %v574, 1.442695
    %v587 = vpow.pop %v586
    %v588 = vmul.f32 %v575, 1.442695
    %v589 = vpow.pop %v588
    %v590 = vmul.f32 %v576, 1.442695
    %v591 = vpow.pop %v590
    %v592 = vmul.f32 %v577, 1.442695
    %v593 = vpow.pop %v592
    %v594 = vsel %vm545, %v579, 0.0
    %595 = vadd.xlane.f32.xlu0 %v594
    %v596 = vpop.xlane.xlu0 %595
    %v597 = vsel %vm545, %v581, 0.0
    %598 = vadd.xlane.f32.xlu0 %v597
    %v599 = vpop.xlane.xlu0 %598
    %v600 = vsel %vm545, %v583, 0.0
    %601 = vadd.xlane.f32.xlu0 %v600
    %v602 = vpop.xlane.xlu0 %601
    %v603 = vsel %vm545, %v585, 0.0
    %604 = vadd.xlane.f32.xlu0 %v603
    %v605 = vpop.xlane.xlu0 %604
    %v606 = vsel %vm545, %v587, 0.0
    %607 = vadd.xlane.f32.xlu0 %v606
    %v608 = vpop.xlane.xlu0 %607
    %v609 = vsel %vm545, %v589, 0.0
    %610 = vadd.xlane.f32.xlu0 %v609
    %v611 = vpop.xlane.xlu0 %610
    %v612 = vsel %vm545, %v591, 0.0
    %613 = vadd.xlane.f32.xlu0 %v612
    %v614 = vpop.xlane.xlu0 %613
    %v615 = vsel %vm545, %v593, 0.0
    %616 = vadd.xlane.f32.xlu0 %v615
    %v617 = vpop.xlane.xlu0 %616
    %v618 = vrcp.pop %v596
    %v619 = vrcp.pop %v599
    %v620 = vrcp.pop %v602
    %v621 = vrcp.pop %v605
    %v622 = vrcp.pop %v608
    %v623 = vrcp.pop %v611
    %v624 = vrcp.pop %v614
    %v625 = vrcp.pop %v617
    %v626 = vmul.f32 %v579, %v618
    %v627 = vmul.f32 %v581, %v619
    %v628 = vmul.f32 %v583, %v620
    %v629 = vmul.f32 %v585, %v621
    %v630 = vmul.f32 %v587, %v622
    %v631 = vmul.f32 %v589, %v623
    %v632 = vmul.f32 %v591, %v624
    %v633 = vmul.f32 %v593, %v625
    %v634 = vpack.c.bf16 %v626, %v626
    %v635 = vpack.c.bf16 %v627, %v627
    %v636 = vpack.c.bf16 %v628, %v628
    %v637 = vpack.c.bf16 %v629, %v629
    %v638 = vpack.c.bf16 %v630, %v630
    %v639 = vpack.c.bf16 %v631, %v631
    %v640 = vpack.c.bf16 %v632, %v632
    %v641 = vpack.c.bf16 %v633, %v633
    %v644 = vunpack.c.l.b16 %v634
    %v645 = vunpack.c.l.b16 %v635
    %v646 = vpack.c.b16 %v645, %v644
    %v647 = vunpack.c.l.b16 %v341
    %v648 = vunpack.c.l.b16 %v342
    %v649 = vpack.c.b16 %v648, %v647
    %v652 = vsel %vm545, %v646, 0
    %654 = vmatpush.bf16.msra.mxu0 0
    %655 = vmatpush.bf16.msra.mxu0 0
    %656 = vmatpush.bf16.msra.mxu0 0
    %657 = vmatpush.bf16.msra.mxu0 0
    %658 = vmatpush.bf16.msra.mxu0 0
    %659 = vmatpush.bf16.msra.mxu0 0
    %660 = vmatpush.bf16.msra.mxu0 0
    %661 = vmatpush.bf16.msra.mxu0 %v649
    %662 = vmatmul.bf16.gmra.mxu0 %v652
    %v663 = vpop.f32.mrf.mxu0
    %v664 = vadd.f32 0.0, %v663
    %v665 = vpop.f32.mrf.mxu0
    %v666 = vadd.f32 0.0, %v665
    %667 = vdwg.mxu0
    %v670 = vunpack.c.l.b16 %v636
    %v671 = vunpack.c.l.b16 %v637
    %v672 = vpack.c.b16 %v671, %v670
    %v673 = vunpack.c.l.b16 %v374
    %v674 = vunpack.c.l.b16 %v376
    %v675 = vpack.c.b16 %v674, %v673
    %v678 = vsel %vm545, %v672, 0
    %680 = vmatpush.bf16.msra.mxu0 0
    %681 = vmatpush.bf16.msra.mxu0 0
    %682 = vmatpush.bf16.msra.mxu0 0
    %683 = vmatpush.bf16.msra.mxu0 0
    %684 = vmatpush.bf16.msra.mxu0 0
    %685 = vmatpush.bf16.msra.mxu0 0
    %686 = vmatpush.bf16.msra.mxu0 0
    %687 = vmatpush.bf16.msra.mxu0 %v675
    %688 = vmatmul.bf16.gmra.mxu0 %v678
    %v689 = vpop.f32.mrf.mxu0
    %v690 = vadd.f32 0.0, %v689
    %v691 = vpop.f32.mrf.mxu0
    %v692 = vadd.f32 0.0, %v691
    %693 = vdwg.mxu0
    %v696 = vunpack.c.l.b16 %v638
    %v697 = vunpack.c.l.b16 %v639
    %v698 = vpack.c.b16 %v697, %v696
    %v699 = vunpack.c.l.b16 %v378
    %v700 = vunpack.c.l.b16 %v380
    %v701 = vpack.c.b16 %v700, %v699
    %v704 = vsel %vm545, %v698, 0
    %706 = vmatpush.bf16.msra.mxu0 0
    %707 = vmatpush.bf16.msra.mxu0 0
    %708 = vmatpush.bf16.msra.mxu0 0
    %709 = vmatpush.bf16.msra.mxu0 0
    %710 = vmatpush.bf16.msra.mxu0 0
    %711 = vmatpush.bf16.msra.mxu0 0
    %712 = vmatpush.bf16.msra.mxu0 0
    %713 = vmatpush.bf16.msra.mxu0 %v701
    %714 = vmatmul.bf16.gmra.mxu0 %v704
    %v715 = vpop.f32.mrf.mxu0
    %v716 = vadd.f32 0.0, %v715
    %v717 = vpop.f32.mrf.mxu0
    %v718 = vadd.f32 0.0, %v717
    %719 = vdwg.mxu0
    %v722 = vunpack.c.l.b16 %v640
    %v723 = vunpack.c.l.b16 %v641
    %v724 = vpack.c.b16 %v723, %v722
    %v725 = vunpack.c.l.b16 %v382
    %v726 = vunpack.c.l.b16 %v384
    %v727 = vpack.c.b16 %v726, %v725
    %v730 = vsel %vm545, %v724, 0
    %732 = vmatpush.bf16.msra.mxu0 0
    %733 = vmatpush.bf16.msra.mxu0 0
    %734 = vmatpush.bf16.msra.mxu0 0
    %735 = vmatpush.bf16.msra.mxu0 0
    %736 = vmatpush.bf16.msra.mxu0 0
    %737 = vmatpush.bf16.msra.mxu0 0
    %738 = vmatpush.bf16.msra.mxu0 0
    %739 = vmatpush.bf16.msra.mxu0 %v727
    %740 = vmatmul.bf16.gmra.mxu0 %v730
    %v741 = vpop.f32.mrf.mxu0
    %v742 = vadd.f32 0.0, %v741
    %v743 = vpop.f32.mrf.mxu0
    %v744 = vadd.f32 0.0, %v743
    %745 = vdwg.mxu0
    %v746 = vpack.c.bf16 %v664, %v664
    %v747 = vpack.c.bf16 %v666, %v666
    %v748 = vpack.c.bf16 %v690, %v690
    %v749 = vpack.c.bf16 %v692, %v692
    %v750 = vpack.c.bf16 %v716, %v716
    %v751 = vpack.c.bf16 %v718, %v718
    %v752 = vpack.c.bf16 %v742, %v742
    %v753 = vpack.c.bf16 %v744, %v744
    %v754 = vld [vmem:[#allocation8] sm:$0xf]
    %v755 = vld [vmem:[#allocation8 + $0x4] sm:$0xf]
    %v756 = vld [vmem:[#allocation8 + $0x8] sm:$0xf]
    %v757 = vld [vmem:[#allocation8 + $0xc] sm:$0xf]
    %v758 = vld [vmem:[#allocation8 + $0x10] sm:$0xf]
    %v759 = vld [vmem:[#allocation8 + $0x14] sm:$0xf]
    %v760 = vld [vmem:[#allocation8 + $0x18] sm:$0xf]
    %v761 = vld [vmem:[#allocation8 + $0x1c] sm:$0xf]
    %v762 = vld [vmem:[#allocation8 + $0x20] sm:$0xf]
    %v763 = vld [vmem:[#allocation8 + $0x24] sm:$0xf]
    %v764 = vld [vmem:[#allocation8 + $0x28] sm:$0xf]
    %v765 = vld [vmem:[#allocation8 + $0x2c] sm:$0xf]
    %v766 = vld [vmem:[#allocation8 + $0x30] sm:$0xf]
    %v767 = vld [vmem:[#allocation8 + $0x34] sm:$0xf]
    %v768 = vld [vmem:[#allocation8 + $0x38] sm:$0xf]
    %v769 = vld [vmem:[#allocation8 + $0x3c] sm:$0xf]
    %v772 = vunpack.c.l.b16 %v746
    %v773 = vunpack.c.l.b16 %v747
    %v774 = vpack.c.b16 %v773, %v772
    %v779 = vunpack.c.l.b16 %v754
    %v780 = vunpack.c.l.b16 %v755
    %v781 = vunpack.c.l.b16 %v756
    %v782 = vunpack.c.l.b16 %v757
    %v783 = vpack.c.b16 %v780, %v779
    %v784 = vpack.c.b16 %v782, %v781
    %v788 = vsel %vm391, %v774, 0
    %790 = vmatpush.bf16.msra.mxu0 0
    %791 = vmatpush.bf16.msra.mxu0 0
    %792 = vmatpush.bf16.msra.mxu0 0
    %793 = vmatpush.bf16.msra.mxu0 0
    %794 = vmatpush.bf16.msra.mxu0 0
    %795 = vmatpush.bf16.msra.mxu0 0
    %796 = vmatpush.bf16.msra.mxu0 %v784
    %797 = vmatpush.bf16.msra.mxu0 %v783
    %798 = vmatmul.bf16.gmra.mxu0 %v788
    %v799 = vpop.f32.mrf.mxu0
    %v800 = vadd.f32 0.0, %v799
    %v801 = vpop.f32.mrf.mxu0
    %v802 = vadd.f32 0.0, %v801
    %803 = vdwg.mxu0
    %v806 = vunpack.c.l.b16 %v748
    %v807 = vunpack.c.l.b16 %v749
    %v808 = vpack.c.b16 %v807, %v806
    %v813 = vunpack.c.l.b16 %v758
    %v814 = vunpack.c.l.b16 %v759
    %v815 = vunpack.c.l.b16 %v760
    %v816 = vunpack.c.l.b16 %v761
    %v817 = vpack.c.b16 %v814, %v813
    %v818 = vpack.c.b16 %v816, %v815
    %v822 = vsel %vm391, %v808, 0
    %824 = vmatpush.bf16.msra.mxu0 0
    %825 = vmatpush.bf16.msra.mxu0 0
    %826 = vmatpush.bf16.msra.mxu0 0
    %827 = vmatpush.bf16.msra.mxu0 0
    %828 = vmatpush.bf16.msra.mxu0 0
    %829 = vmatpush.bf16.msra.mxu0 0
    %830 = vmatpush.bf16.msra.mxu0 %v818
    %831 = vmatpush.bf16.msra.mxu0 %v817
    %832 = vmatmul.bf16.gmra.mxu0 %v822
    %v833 = vpop.f32.mrf.mxu0
    %v834 = vadd.f32 0.0, %v833
    %v835 = vpop.f32.mrf.mxu0
    %v836 = vadd.f32 0.0, %v835
    %837 = vdwg.mxu0
    %v840 = vunpack.c.l.b16 %v750
    %v841 = vunpack.c.l.b16 %v751
    %v842 = vpack.c.b16 %v841, %v840
    %v847 = vunpack.c.l.b16 %v762
    %v848 = vunpack.c.l.b16 %v763
    %v849 = vunpack.c.l.b16 %v764
    %v850 = vunpack.c.l.b16 %v765
    %v851 = vpack.c.b16 %v848, %v847
    %v852 = vpack.c.b16 %v850, %v849
    %v856 = vsel %vm391, %v842, 0
    %858 = vmatpush.bf16.msra.mxu0 0
    %859 = vmatpush.bf16.msra.mxu0 0
    %860 = vmatpush.bf16.msra.mxu0 0
    %861 = vmatpush.bf16.msra.mxu0 0
    %862 = vmatpush.bf16.msra.mxu0 0
    %863 = vmatpush.bf16.msra.mxu0 0
    %864 = vmatpush.bf16.msra.mxu0 %v852
    %865 = vmatpush.bf16.msra.mxu0 %v851
    %866 = vmatmul.bf16.gmra.mxu0 %v856
    %v867 = vpop.f32.mrf.mxu0
    %v868 = vadd.f32 0.0, %v867
    %v869 = vpop.f32.mrf.mxu0
    %v870 = vadd.f32 0.0, %v869
    %871 = vdwg.mxu0
    %v874 = vunpack.c.l.b16 %v752
    %v875 = vunpack.c.l.b16 %v753
    %v876 = vpack.c.b16 %v875, %v874
    %v881 = vunpack.c.l.b16 %v766
    %v882 = vunpack.c.l.b16 %v767
    %v883 = vunpack.c.l.b16 %v768
    %v884 = vunpack.c.l.b16 %v769
    %v885 = vpack.c.b16 %v882, %v881
    %v886 = vpack.c.b16 %v884, %v883
    %v890 = vsel %vm391, %v876, 0
    %892 = vmatpush.bf16.msra.mxu0 0
    %893 = vmatpush.bf16.msra.mxu0 0
    %894 = vmatpush.bf16.msra.mxu0 0
    %895 = vmatpush.bf16.msra.mxu0 0
    %896 = vmatpush.bf16.msra.mxu0 0
    %897 = vmatpush.bf16.msra.mxu0 0
    %898 = vmatpush.bf16.msra.mxu0 %v886
    %899 = vmatpush.bf16.msra.mxu0 %v885
    %900 = vmatmul.bf16.gmra.mxu0 %v890
    %v901 = vpop.f32.mrf.mxu0
    %v902 = vadd.f32 0.0, %v901
    %v903 = vpop.f32.mrf.mxu0
    %v904 = vadd.f32 0.0, %v903
    %905 = vdwg.mxu0
    %v906 = vadd.f32 %v800, %v834
    %v907 = vadd.f32 %v906, %v868
    %v908 = vadd.f32 %v907, %v902
    %v909 = vadd.f32 %v802, %v836
    %v910 = vadd.f32 %v909, %v870
    %v911 = vadd.f32 %v910, %v904
    %v912 = vld [vmem:[%s4] sm:$0x1]
    %v914 = vperm.slane %v912, 0
    %v916 = vadd.f32 %v908, %v914
    %v917 = vadd.f32 %v911, %v914
    %v920 = vrot.slane %v916, 2
    %v921 = vrot.slane %v916, 4
    %v922 = vrot.slane %v916, 6
    %v923 = vrot.slane %v917, 2
    %v924 = vrot.slane %v917, 4
    %v925 = vrot.slane %v917, 6
    %v932 = vadd.f32 %v89, %v916
    %v933 = vadd.f32 %v90, %v920
    %v934 = vadd.f32 %v91, %v921
    %v935 = vadd.f32 %v92, %v922
    %v936 = vadd.f32 %v93, %v917
    %v937 = vadd.f32 %v94, %v923
    %v938 = vadd.f32 %v95, %v924
    %v939 = vadd.f32 %v96, %v925
    %948 = vst [vmem:[#allocation1] ss:$4 sm:$0xff] %v932
    %s949 = scalar_lea.vmem [#allocation1], 1
    %950 = vst [vmem:[%s949] ss:$4 sm:$0xff] %v933
    %s951 = scalar_lea.vmem [#allocation1], 2
    %952 = vst [vmem:[%s951] ss:$4 sm:$0xff] %v934
    %s953 = scalar_lea.vmem [#allocation1], 3
    %954 = vst [vmem:[%s953] ss:$4 sm:$0xff] %v935
    %s955 = scalar_lea.vmem [#allocation1], 32
    %956 = vst [vmem:[%s955] ss:$4 sm:$0xff] %v936
    %s957 = scalar_lea.vmem [#allocation1], 33
    %958 = vst [vmem:[%s957] ss:$4 sm:$0xff] %v937
    %s959 = scalar_lea.vmem [#allocation1], 34
    %960 = vst [vmem:[%s959] ss:$4 sm:$0xff] %v938
    %s961 = scalar_lea.vmem [#allocation1], 35
    %962 = vst [vmem:[%s961] ss:$4 sm:$0xff] %v939
    %v963 = vld.sshfl [vmem:[#allocation1] sm:$0xff pattern:$0x73625140]
    %v964 = vld.sshfl [vmem:[#allocation1 + $0x20] sm:$0xff pattern:$0x73625140]
    %967 = vadd.xlane.f32.xlu0 %v963
    %v968 = vpop.xlane.xlu0 %967
    %969 = vadd.xlane.f32.xlu0 %v964
    %v970 = vpop.xlane.xlu0 %969
    %v971 = vrcp.pop 128.0
    %v972 = vmul.f32 128.0, %v971
    %v973 = vsub.f32 1.0, %v972
    %v974 = vmul.f32 %v971, %v973
    %v975 = vadd.f32 %v971, %v974
    %vm976 = vweird.f32 %v971
    %v977 = vsel %vm976, %v971, %v975
    %v978 = vmul.f32 %v968, %v977
    %v979 = vmul.f32 %v970, %v977
    %v983 = vunpack.c.l.s4 269488144
    %v984 = vunpack.c.0.s8 %v983
    %v985 = vperm.slane %v978, %v984
    %v987 = vunpack.c.l.s4 842150450
    %v988 = vunpack.c.0.s8 %v987
    %v989 = vperm.slane %v978, %v988
    %v991 = vunpack.c.l.s4 1414812756
    %v992 = vunpack.c.0.s8 %v991
    %v993 = vperm.slane %v978, %v992
    %v995 = vunpack.c.l.s4 1987475062
    %v996 = vunpack.c.0.s8 %v995
    %v997 = vperm.slane %v978, %v996
    %v999 = vunpack.c.l.s4 269488144
    %v1000 = vunpack.c.0.s8 %v999
    %v1001 = vperm.slane %v979, %v1000
    %v1003 = vunpack.c.l.s4 842150450
    %v1004 = vunpack.c.0.s8 %v1003
    %v1005 = vperm.slane %v979, %v1004
    %v1007 = vunpack.c.l.s4 1414812756
    %v1008 = vunpack.c.0.s8 %v1007
    %v1009 = vperm.slane %v979, %v1008
    %v1011 = vunpack.c.l.s4 1987475062
    %v1012 = vunpack.c.0.s8 %v1011
    %v1013 = vperm.slane %v979, %v1012
    %v1022 = vsub.f32 %v932, %v985
    %v1023 = vsub.f32 %v933, %v989
    %v1024 = vsub.f32 %v934, %v993
    %v1025 = vsub.f32 %v935, %v997
    %v1026 = vsub.f32 %v936, %v1001
    %v1027 = vsub.f32 %v937, %v1005
    %v1028 = vsub.f32 %v938, %v1009
    %v1029 = vsub.f32 %v939, %v1013
    %v1030 = vmul.f32 %v1022, %v1022
    %v1031 = vmul.f32 %v1023, %v1023
    %v1032 = vmul.f32 %v1024, %v1024
    %v1033 = vmul.f32 %v1025, %v1025
    %v1034 = vmul.f32 %v1026, %v1026
    %v1035 = vmul.f32 %v1027, %v1027
    %v1036 = vmul.f32 %v1028, %v1028
    %v1037 = vmul.f32 %v1029, %v1029
    %1046 = vst [vmem:[#allocation1] ss:$4 sm:$0xff] %v1030
    %s1047 = scalar_lea.vmem [#allocation1], 1
    %1048 = vst [vmem:[%s1047] ss:$4 sm:$0xff] %v1031
    %s1049 = scalar_lea.vmem [#allocation1], 2
    %1050 = vst [vmem:[%s1049] ss:$4 sm:$0xff] %v1032
    %s1051 = scalar_lea.vmem [#allocation1], 3
    %1052 = vst [vmem:[%s1051] ss:$4 sm:$0xff] %v1033
    %s1053 = scalar_lea.vmem [#allocation1], 32
    %1054 = vst [vmem:[%s1053] ss:$4 sm:$0xff] %v1034
    %s1055 = scalar_lea.vmem [#allocation1], 33
    %1056 = vst [vmem:[%s1055] ss:$4 sm:$0xff] %v1035
    %s1057 = scalar_lea.vmem [#allocation1], 34
    %1058 = vst [vmem:[%s1057] ss:$4 sm:$0xff] %v1036
    %s1059 = scalar_lea.vmem [#allocation1], 35
    %1060 = vst [vmem:[%s1059] ss:$4 sm:$0xff] %v1037
    %v1061 = vld.sshfl [vmem:[#allocation1] sm:$0xff pattern:$0x73625140]
    %v1062 = vld.sshfl [vmem:[#allocation1 + $0x20] sm:$0xff pattern:$0x73625140]
    %1065 = vadd.xlane.f32.xlu0 %v1061
    %v1066 = vpop.xlane.xlu0 %1065
    %1067 = vadd.xlane.f32.xlu0 %v1062
    %v1068 = vpop.xlane.xlu0 %1067
    %v1069 = vmul.f32 %v1066, %v977
    %v1070 = vmul.f32 %v1068, %v977
    %v1071 = vadd.f32 %v1069, 1e-05
    %v1072 = vadd.f32 %v1070, 1e-05
    %v1073 = vrsqrt.pop %v1071
    %v1074 = vmul.f32 %v1073, %v1071
    %v1075 = vmul.f32 %v1074, %v1073
    %v1076 = vmul.f32 0.5, %v1075
    %v1077 = vsub.f32 1.5, %v1076
    %v1078 = vmul.f32 %v1073, %v1077
    %vm1079 = vweird.f32 %v1071
    %vm1080 = vweird.f32 %v1073
    %vm1081 = vmor %vm1079, %vm1080
    %v1082 = vsel %vm1081, %v1073, %v1078
    %v1083 = vrsqrt.pop %v1072
    %v1084 = vmul.f32 %v1083, %v1072
    %v1085 = vmul.f32 %v1084, %v1083
    %v1086 = vmul.f32 0.5, %v1085
    %v1087 = vsub.f32 1.5, %v1086
    %v1088 = vmul.f32 %v1083, %v1087
    %vm1089 = vweird.f32 %v1072
    %vm1090 = vweird.f32 %v1083
    %vm1091 = vmor %vm1089, %vm1090
    %v1092 = vsel %vm1091, %v1083, %v1088
    %v1096 = vunpack.c.l.s4 269488144
    %v1097 = vunpack.c.0.s8 %v1096
    %v1098 = vperm.slane %v1082, %v1097
    %v1100 = vunpack.c.l.s4 842150450
    %v1101 = vunpack.c.0.s8 %v1100
    %v1102 = vperm.slane %v1082, %v1101
    %v1104 = vunpack.c.l.s4 1414812756
    %v1105 = vunpack.c.0.s8 %v1104
    %v1106 = vperm.slane %v1082, %v1105
    %v1108 = vunpack.c.l.s4 1987475062
    %v1109 = vunpack.c.0.s8 %v1108
    %v1110 = vperm.slane %v1082, %v1109
    %v1112 = vunpack.c.l.s4 269488144
    %v1113 = vunpack.c.0.s8 %v1112
    %v1114 = vperm.slane %v1092, %v1113
    %v1116 = vunpack.c.l.s4 842150450
    %v1117 = vunpack.c.0.s8 %v1116
    %v1118 = vperm.slane %v1092, %v1117
    %v1120 = vunpack.c.l.s4 1414812756
    %v1121 = vunpack.c.0.s8 %v1120
    %v1122 = vperm.slane %v1092, %v1121
    %v1124 = vunpack.c.l.s4 1987475062
    %v1125 = vunpack.c.0.s8 %v1124
    %v1126 = vperm.slane %v1092, %v1125
    %v1135 = vmul.f32 %v1022, %v1098
    %v1136 = vmul.f32 %v1023, %v1102
    %v1137 = vmul.f32 %v1024, %v1106
    %v1138 = vmul.f32 %v1025, %v1110
    %v1139 = vmul.f32 %v1026, %v1114
    %v1140 = vmul.f32 %v1027, %v1118
    %v1141 = vmul.f32 %v1028, %v1122
    %v1142 = vmul.f32 %v1029, %v1126
    %v1143 = vld [vmem:[%s5] sm:$0x1]
    %v1145 = vperm.slane %v1143, 0
    %v1147 = vrot.slane %v1145, 2
    %v1148 = vrot.slane %v1145, 4
    %v1149 = vrot.slane %v1145, 6
    %v1153 = vmul.f32 %v1135, %v1145
    %v1154 = vmul.f32 %v1136, %v1147
    %v1155 = vmul.f32 %v1137, %v1148
    %v1156 = vmul.f32 %v1138, %v1149
    %v1157 = vmul.f32 %v1139, %v1145
    %v1158 = vmul.f32 %v1140, %v1147
    %v1159 = vmul.f32 %v1141, %v1148
    %v1160 = vmul.f32 %v1142, %v1149
    %v1161 = vld [vmem:[%s6] sm:$0x1]
    %v1163 = vperm.slane %v1161, 0
    %v1165 = vrot.slane %v1163, 2
    %v1166 = vrot.slane %v1163, 4
    %v1167 = vrot.slane %v1163, 6
    %v1171 = vadd.f32 %v1153, %v1163
    %v1172 = vadd.f32 %v1154, %v1165
    %v1173 = vadd.f32 %v1155, %v1166
    %v1174 = vadd.f32 %v1156, %v1167
    %v1175 = vadd.f32 %v1157, %v1163
    %v1176 = vadd.f32 %v1158, %v1165
    %v1177 = vadd.f32 %v1159, %v1166
    %v1178 = vadd.f32 %v1160, %v1167
    %1179 = vst [vmem:[#allocation10] sm:$0x3] %v1171
    %1180 = vst [vmem:[#allocation10 + $0x2] sm:$0x3] %v1172
    %1181 = vst [vmem:[#allocation10 + $0x4] sm:$0x3] %v1173
    %1182 = vst [vmem:[#allocation10 + $0x6] sm:$0x3] %v1174
    %1183 = vst [vmem:[#allocation10 + $0x8] sm:$0x3] %v1175
    %1184 = vst [vmem:[#allocation10 + $0xa] sm:$0x3] %v1176
    %1185 = vst [vmem:[#allocation10 + $0xc] sm:$0x3] %v1177
    %1186 = vst [vmem:[#allocation10 + $0xe] sm:$0x3] %v1178
    // Predicated region
    $region46: #{tpu_custom_call.1} parent=1 // pred_check
      _
    $region47: #{tpu_custom_call.1} parent=1 // pred_check_branch
      %1188 = sbr.rel (0) target = $region49
    $region48: #{tpu_custom_call.1} parent=1 // pred_region
      %1190 = vsyncadd [#allocation4], 0
      %s1191 = sshll.u32 [#allocation10], 4
      %s1192 = int_to_ptr.vmem [resolvable:$true] %s1191
      %s1193 = sshll.u32 %s7, 4
      %s1194 = int_to_ptr.hbm [resolvable:$true] %s1193
      %1199 = dma.vmem_to_hbm [thread:$0]  %s1192, 256, %s1194, [#allocation4], 32, 32, 2
    $region49: #{tpu_custom_call.1} parent=1 // pred_fallthru
      _
    // Predicated region
    $region50: #{tpu_custom_call.1} parent=1 // pred_check
      _
    $region51: #{tpu_custom_call.1} parent=1 // pred_check_branch
      %1201 = sbr.rel (0) target = $region53
    $region52: #{tpu_custom_call.1} parent=1 // pred_region
      %1203 = dma.done [#allocation4], 256
    $region53: #{tpu_custom_call.1} parent=1 // pred_fallthru
      _
    %1204 = vsyncpa [#allocation3], 1
    %1205 = vsyncpa [#allocation6], 1
    %1206 = vsyncpa [#allocation9], 1
    %1207 = vsyncpa [#allocation4], 1

</llo_original>
